<compile_context>
chip_gen: v7x
topology: tpu7x:2x2x1
jax: 0.10.0
libtpu: 0.0.40
codegen_flags: <defaults>
</compile_context>

<pallas_src>
import functools

import jax
import jax.numpy as jnp
from jax.experimental import pallas as pl
from jax.experimental.pallas import tpu as pltpu

LANE = 128
SUBLANE = 8


def _round_up(x, m):
    return ((x + m - 1) // m) * m


def moe_kernel(comp_ref, tok_ref, w_ref, b_ref, eidx_ref, p_ref, out_ref,
               acc_ref, *, inv_len):
    """Grid = (batch_tiles, seq_tiles); the seq axis is the 'arbitrary' reduction axis.

    comp_ref : VMEM i32[BT, 1]       per-sample component index (-2 in batch padding)
    tok_ref  : VMEM bf16[BT, LT, H]  token embeddings for this (batch, seq) tile
    w_ref    : VMEM bf16[H, NECp]    all expert weights, flat column k = e*C + c
    b_ref    : VMEM f32[1, NECp]     all expert biases (same flat layout)
    eidx_ref : VMEM i32[1, NECp]     expert id of each flat column (-1 in lane padding)
    p_ref    : VMEM f32[NECp, Cp]    0/1 class projection: P[k, k % C] = 1 for k < NE*C
    out_ref  : VMEM f32[BT, Cp]      lane-dense output slab (real classes in [:C])
    acc_ref  : VMEM f32[BT, H]       sequence-sum accumulator (persists across seq axis)
    """
    l = pl.program_id(1)

    @pl.when(l == 0)
    def _():
        acc_ref[...] = jnp.zeros_like(acc_ref)

    # mean-pool: stream bf16 tokens, upcast, accumulate partial sums in f32.
    # Zero-padded (batch / sequence) tokens contribute exactly zero.
    acc_ref[...] += jnp.sum(tok_ref[...].astype(jnp.float32), axis=1)

    @pl.when(l == pl.num_programs(1) - 1)
    def _():
        pooled = acc_ref[...] * inv_len                      # (BT, H), mean over true L
        # IdentityDNAFeatureTransformer -> identity

        # all experts' logits for the whole tile: one dense bf16 MXU matmul, f32 acc
        all_logits = jnp.dot(pooled.astype(jnp.bfloat16), w_ref[...],
                             preferred_element_type=jnp.float32)        # (BT, NECp)
        all_logits = all_logits + b_ref[...]

        # exact 0/1 routing mask (lane-padding columns / padded batch rows never match)
        mask = (eidx_ref[...] == comp_ref[...]).astype(jnp.float32)     # (BT, NECp)

        # project the routed expert's C logits into the lane-dense output slab
        out_ref[...] = jnp.dot(all_logits * mask, p_ref[...],
                               preferred_element_type=jnp.float32)      # (BT, Cp)


def dhs_moe_forward(token_emb, component_idx, expert_w, expert_b, *,
                    max_batch_tile=512, max_seq_tile=512):
    """token_emb: f[B, L, H]; component_idx: i[B];
    expert_w: f[NE, H, C]; expert_b: f[NE, C]  ->  f32[B, C]."""
    B, L, H = token_emb.shape
    NE, _, C = expert_w.shape
    NEC = NE * C
    NECp = _round_up(NEC, LANE)     # flat expert-logit axis, lane padded
    Cp = LANE                       # lane-dense output slab (classes live in [:C])

    # ---- per-generation VMEM budget (v5e/v6e: 128 MiB, v7x: 64 MiB per TC) ----
    try:
        vmem_cap = int(pltpu.get_tpu_info().vmem_capacity_bytes)
    except Exception:
        vmem_cap = 64 * 1024 * 1024        # conservative fallback (v7x per-TC VMEM)
    budget = min(int(0.65 * vmem_cap), 80 * 1024 * 1024)      # per-step working set
    vmem_limit = min(int(0.85 * vmem_cap), 100 * 1024 * 1024)  # raise scoped limit

    # ---- tile sizing ----
    # Batch: pad only to a multiple of 8, split into near-equal 8-aligned tiles.
    Bp8 = _round_up(B, SUBLANE)
    n_bt = -(-Bp8 // max_batch_tile)
    BT = _round_up(-(-Bp8 // n_bt), SUBLANE)
    # Sequence: full extent when small (legal block), else 8-aligned reduction tiles.
    LT = L if L <= max_seq_tile else max_seq_tile

    def vmem_need(bt, lt):
        return (2 * bt * lt * H * 2          # bf16 token stream, double-buffered
                + 2 * bt * 4                 # component indices
                + 2 * H * NECp * 2           # bf16 expert weight slab (resident)
                + 2 * 2 * NECp * 4           # biases + expert-id row
                + 2 * NECp * Cp * 4          # class projection
                + 2 * bt * Cp * 4            # output slab
                + bt * H * 4)                # f32 pooling accumulator scratch

    while vmem_need(BT, LT) > budget:
        if LT >= BT and LT > SUBLANE:
            LT = max(SUBLANE, ((LT // 2) + SUBLANE - 1) // SUBLANE * SUBLANE)
        elif BT > SUBLANE:
            BT = max(SUBLANE, ((BT // 2) + SUBLANE - 1) // SUBLANE * SUBLANE)
        elif LT > SUBLANE:
            LT = max(SUBLANE, ((LT // 2) + SUBLANE - 1) // SUBLANE * SUBLANE)
        else:
            break

    if LT >= L:
        LT, Lp = L, L
    else:
        LT = max(SUBLANE, (LT // SUBLANE) * SUBLANE)
        Lp = _round_up(L, LT)
    n_lt = Lp // LT
    n_bt = -(-Bp8 // BT)
    Bp = n_bt * BT

    bf16, f32, i32 = jnp.bfloat16, jnp.float32, jnp.int32

    # token stream in bf16; zero-pad only along batch / sequence, and only if needed
    tok_in = token_emb.astype(bf16)
    if (Bp, Lp) != (B, L):
        tok_in = jnp.zeros((Bp, Lp, H), bf16).at[:B, :L, :].set(tok_in)

    # per-sample component index; padded batch rows get -2 (matches no expert column)
    comp2d = jnp.full((Bp, 1), -2, i32).at[:B, 0].set(component_idx.astype(i32))

    # all expert weights as one flat (H, NE*C) bf16 slab, lane-padded to NECp
    w2d = jnp.transpose(expert_w.astype(bf16), (1, 0, 2)).reshape(H, NEC)
    wflat = w2d if NECp == NEC else jnp.zeros((H, NECp), bf16).at[:, :NEC].set(w2d)

    bflat = jnp.zeros((1, NECp), f32).at[0, :NEC].set(expert_b.astype(f32).reshape(NEC))
    eidx = jnp.full((1, NECp), -1, i32).at[0, :NEC].set(jnp.arange(NEC, dtype=i32) // C)
    kk = jnp.arange(NEC)
    pmat = jnp.zeros((NECp, Cp), f32).at[kk, kk % C].set(1.0)

    grid_spec = pltpu.PrefetchScalarGridSpec(
        num_scalar_prefetch=0,
        grid=(n_bt, n_lt),                                     # reduction axis last
        in_specs=[
            pl.BlockSpec((BT, 1), lambda t, l: (t, 0)),        # component indices
            pl.BlockSpec((BT, LT, H), lambda t, l: (t, l, 0)),  # token tile (unpadded H)
            # resident operands (constant index_map -> not re-DMAed across the grid)
            pl.BlockSpec((H, NECp), lambda t, l: (0, 0)),       # expert weights
            pl.BlockSpec((1, NECp), lambda t, l: (0, 0)),       # expert biases
            pl.BlockSpec((1, NECp), lambda t, l: (0, 0)),       # flat expert-id row
            pl.BlockSpec((NECp, Cp), lambda t, l: (0, 0)),      # class projection
        ],
        out_specs=pl.BlockSpec((BT, Cp), lambda t, l: (t, 0)),
        scratch_shapes=[pltpu.VMEM((BT, H), jnp.float32)],      # pooling accumulator
    )

    cost = pl.CostEstimate(
        flops=int(Bp * Lp * H + 2 * Bp * H * NECp + 2 * Bp * NECp * Cp),
        transcendentals=0,
        bytes_accessed=int(2 * Bp * Lp * H           # bf16 tokens (dominant stream)
                           + 4 * Bp                  # component indices
                           + 2 * H * NECp            # bf16 weight slab
                           + 4 * 2 * NECp            # biases + expert ids
                           + 4 * NECp * Cp           # class projection
                           + 4 * Bp * Cp),           # output
    )

    out = pl.pallas_call(
        functools.partial(moe_kernel, inv_len=1.0 / float(L)),
        out_shape=jax.ShapeDtypeStruct((Bp, Cp), jnp.float32),
        grid_spec=grid_spec,
        compiler_params=pltpu.CompilerParams(
            # batch-tile axis is independent (shardable across TensorCores); the
            # sequence axis carries the pooling accumulator -> must stay "arbitrary".
            dimension_semantics=("parallel", "arbitrary"),
            vmem_limit_bytes=vmem_limit,
        ),
        cost_estimate=cost,
    )(comp2d, tok_in, wflat, bflat, eidx, pmat)

    return out[:B, :C]


def reference_forward(token_emb, component_idx, expert_w, expert_b):
    """Pure-JAX f32 reference reproducing the PyTorch forward semantics."""
    emb = token_emb.mean(axis=1)                                  # (B, H)
    # identical to the mask / cat / argsort reordering in the PyTorch module
    logits = jnp.einsum("bh,bhc->bc", emb, expert_w[component_idx])
    return logits + expert_b[component_idx]


if __name__ == "__main__":
    B, L, H = 8, 8, 32          # batch, tokenized seq length, hidden size
    NCOMP, C = 20, 2            # ncomponents (module default), num classes

    key = jax.random.PRNGKey(0)
    k_tok, k_comp, k_w, k_b = jax.random.split(key, 4)

    # synthetic "DNABERT-S encoder output": per-token embeddings
    token_emb = jax.random.normal(k_tok, (B, L, H), dtype=jnp.float32)
    component_idx = jax.random.randint(k_comp, (B,), 0, NCOMP, dtype=jnp.int32)

    # deterministic expert (classification module) parameters
    expert_w = 0.02 * jax.random.normal(k_w, (NCOMP, H, C), dtype=jnp.float32)
    expert_b = 0.01 * jax.random.normal(k_b, (NCOMP, C), dtype=jnp.float32)

    out = dhs_moe_forward(token_emb, component_idx, expert_w, expert_b)
    out = jax.block_until_ready(out)

    ref = reference_forward(token_emb, component_idx, expert_w, expert_b)
    # tokens / weights are streamed in bf16 (f32 accumulation) -> bf16-level tolerance
    if not jnp.allclose(out, ref, atol=5e-3, rtol=5e-2):
        raise AssertionError("Pallas MoE kernel does not match reference")

    print("KERNEL_OK")
</pallas_src>

<mosaic_0001>
module attributes {stable_mosaic.version = 11 : i64} {
  func.func @moe_kernel(%arg0: i32, %arg1: i32, %arg2: memref<8x1xi32, #tpu.memory_space<vmem>>, %arg3: memref<8x8x32xbf16, #tpu.memory_space<vmem>>, %arg4: memref<32x128xbf16, #tpu.memory_space<vmem>>, %arg5: memref<1x128xf32, #tpu.memory_space<vmem>>, %arg6: memref<1x128xi32, #tpu.memory_space<vmem>>, %arg7: memref<128x128xf32, #tpu.memory_space<vmem>>, %arg8: memref<8x128xf32, #tpu.memory_space<vmem>>, %arg9: memref<8x32xf32, #tpu.memory_space<vmem>>) attributes {dimension_semantics = [#tpu.dimension_semantics<parallel>, #tpu.dimension_semantics<arbitrary>], iteration_bounds = array<i64: 1, 1>, scalar_prefetch = 0 : i64, scratch_operands = 1 : i64, tpu.core_type = #tpu.core_type<tc>, window_params = [{transform_indices = @transform_0, window_bounds = array<i64: 8, 1>}, {transform_indices = @transform_1, window_bounds = array<i64: 8, 8, 32>}, {pipeline_mode = #tpu.pipeline_mode<synchronous>, transform_indices = @transform_2, window_bounds = array<i64: 32, 128>}, {pipeline_mode = #tpu.pipeline_mode<synchronous>, transform_indices = @transform_3, window_bounds = array<i64: 1, 128>}, {pipeline_mode = #tpu.pipeline_mode<synchronous>, transform_indices = @transform_4, window_bounds = array<i64: 1, 128>}, {pipeline_mode = #tpu.pipeline_mode<synchronous>, transform_indices = @transform_5, window_bounds = array<i64: 128, 128>}, {transform_indices = @transform_6, window_bounds = array<i64: 8, 128>}]} {
    %c0_i32 = arith.constant 0 : i32
    %0 = arith.cmpi eq, %arg1, %c0_i32 : i32
    %1 = arith.extui %0 : i1 to i32
    %c0_i32_0 = arith.constant 0 : i32
    %2 = arith.cmpi ne, %1, %c0_i32_0 : i32
    scf.if %2 {
      %cst_9 = arith.constant 0.000000e+00 : f32
      %12 = vector.broadcast %cst_9 : f32 to vector<8x32xf32>
      %c0_10 = arith.constant 0 : index
      %c0_11 = arith.constant 0 : index
      %13 = vector.load %arg9[%c0_10, %c0_11] : memref<8x32xf32, #tpu.memory_space<vmem>>, vector<8x32xf32>
      tpu.vector_store %arg9[%c0_10, %c0_11], %12 {strides = array<i32>} : memref<8x32xf32, #tpu.memory_space<vmem>>, vector<8x32xf32>,
    } else {
    }
    %c0 = arith.constant 0 : index
    %c0_1 = arith.constant 0 : index
    %3 = vector.load %arg9[%c0, %c0_1] : memref<8x32xf32, #tpu.memory_space<vmem>>, vector<8x32xf32>
    %c0_2 = arith.constant 0 : index
    %c0_3 = arith.constant 0 : index
    %c0_4 = arith.constant 0 : index
    %4 = vector.load %arg3[%c0_2, %c0_3, %c0_4] : memref<8x8x32xbf16, #tpu.memory_space<vmem>>, vector<8x8x32xbf16>
    %5 = arith.extf %4 : vector<8x8x32xbf16> to vector<8x8x32xf32>
    %cst = arith.constant dense<0.000000e+00> : vector<8x32xf32>
    %6 = vector.multi_reduction <add>, %5, %cst [1] : vector<8x8x32xf32> to vector<8x32xf32>
    %7 = arith.addf %3, %6 : vector<8x32xf32>
    %c0_5 = arith.constant 0 : index
    %c0_6 = arith.constant 0 : index
    %8 = vector.load %arg9[%c0_5, %c0_6] : memref<8x32xf32, #tpu.memory_space<vmem>>, vector<8x32xf32>
    tpu.vector_store %arg9[%c0_5, %c0_6], %7 {strides = array<i32>} : memref<8x32xf32, #tpu.memory_space<vmem>>, vector<8x32xf32>,
    %c0_i32_7 = arith.constant 0 : i32
    %9 = arith.cmpi eq, %arg1, %c0_i32_7 : i32
    %10 = arith.extui %9 : i1 to i32
    %c0_i32_8 = arith.constant 0 : i32
    %11 = arith.cmpi ne, %10, %c0_i32_8 : i32
    scf.if %11 {
      %c0_9 = arith.constant 0 : index
      %c0_10 = arith.constant 0 : index
      %12 = vector.load %arg9[%c0_9, %c0_10] : memref<8x32xf32, #tpu.memory_space<vmem>>, vector<8x32xf32>
      %cst_11 = arith.constant 1.250000e-01 : f32
      %13 = vector.broadcast %cst_11 : f32 to vector<8x32xf32>
      %14 = arith.mulf %12, %13 : vector<8x32xf32>
      %15 = arith.truncf %14 : vector<8x32xf32> to vector<8x32xbf16>
      %c0_12 = arith.constant 0 : index
      %c0_13 = arith.constant 0 : index
      %16 = vector.load %arg4[%c0_12, %c0_13] : memref<32x128xbf16, #tpu.memory_space<vmem>>, vector<32x128xbf16>
      %cst_14 = arith.constant dense<0.000000e+00> : vector<8x128xf32>
      %17 = tpu.matmul %15, %16, %cst_14 {dimension_numbers = #tpu.dot_dimension_numbers<[1], [0], [0], [1], [0, 0, 1, 1], [], []>} : vector<8x32xbf16>, vector<32x128xbf16>, vector<8x128xf32> -> vector<8x128xf32>
      %c0_15 = arith.constant 0 : index
      %c0_16 = arith.constant 0 : index
      %18 = vector.load %arg5[%c0_15, %c0_16] : memref<1x128xf32, #tpu.memory_space<vmem>>, vector<1x128xf32>
      %19 = vector.broadcast %18 : vector<1x128xf32> to vector<8x128xf32>
      %20 = arith.addf %17, %19 : vector<8x128xf32>
      %c0_17 = arith.constant 0 : index
      %c0_18 = arith.constant 0 : index
      %21 = vector.load %arg6[%c0_17, %c0_18] : memref<1x128xi32, #tpu.memory_space<vmem>>, vector<1x128xi32>
      %c0_19 = arith.constant 0 : index
      %c0_20 = arith.constant 0 : index
      %22 = vector.load %arg2[%c0_19, %c0_20] : memref<8x1xi32, #tpu.memory_space<vmem>>, vector<8x1xi32>
      %23 = vector.broadcast %21 : vector<1x128xi32> to vector<8x128xi32>
      %24 = vector.broadcast %22 : vector<8x1xi32> to vector<8x128xi32>
      %25 = arith.cmpi eq, %23, %24 : vector<8x128xi32>
      %26 = arith.extui %25 : vector<8x128xi1> to vector<8x128xi32>
      %27 = arith.sitofp %26 : vector<8x128xi32> to vector<8x128xf32>
      %28 = arith.mulf %20, %27 : vector<8x128xf32>
      %c0_21 = arith.constant 0 : index
      %c0_22 = arith.constant 0 : index
      %29 = vector.load %arg7[%c0_21, %c0_22] : memref<128x128xf32, #tpu.memory_space<vmem>>, vector<128x128xf32>
      %cst_23 = arith.constant dense<0.000000e+00> : vector<8x128xf32>
      %30 = tpu.matmul %28, %29, %cst_23 {dimension_numbers = #tpu.dot_dimension_numbers<[1], [0], [0], [1], [0, 0, 1, 1], [], []>} : vector<8x128xf32>, vector<128x128xf32>, vector<8x128xf32> -> vector<8x128xf32>
      %c0_24 = arith.constant 0 : index
      %c0_25 = arith.constant 0 : index
      %31 = vector.load %arg8[%c0_24, %c0_25] : memref<8x128xf32, #tpu.memory_space<vmem>>, vector<8x128xf32>
      tpu.vector_store %arg8[%c0_24, %c0_25], %30 {strides = array<i32>} : memref<8x128xf32, #tpu.memory_space<vmem>>, vector<8x128xf32>,
    } else {
    }
    return
  }
  func.func @transform_0(%arg0: i32, %arg1: i32) -> (i32, i32) {
    %c0_i32 = arith.constant 0 : i32
    %c0_i32_0 = arith.constant 0 : i32
    return %arg0, %c0_i32 : i32, i32
  }
  func.func @transform_1(%arg0: i32, %arg1: i32) -> (i32, i32, i32) {
    %c0_i32 = arith.constant 0 : i32
    %c0_i32_0 = arith.constant 0 : i32
    return %arg0, %arg1, %c0_i32 : i32, i32, i32
  }
  func.func @transform_2(%arg0: i32, %arg1: i32) -> (i32, i32) {
    %c0_i32 = arith.constant 0 : i32
    %c0_i32_0 = arith.constant 0 : i32
    %c0_i32_1 = arith.constant 0 : i32
    return %c0_i32, %c0_i32_0 : i32, i32
  }
  func.func @transform_3(%arg0: i32, %arg1: i32) -> (i32, i32) {
    %c0_i32 = arith.constant 0 : i32
    %c0_i32_0 = arith.constant 0 : i32
    %c0_i32_1 = arith.constant 0 : i32
    return %c0_i32, %c0_i32_0 : i32, i32
  }
  func.func @transform_4(%arg0: i32, %arg1: i32) -> (i32, i32) {
    %c0_i32 = arith.constant 0 : i32
    %c0_i32_0 = arith.constant 0 : i32
    %c0_i32_1 = arith.constant 0 : i32
    return %c0_i32, %c0_i32_0 : i32, i32
  }
  func.func @transform_5(%arg0: i32, %arg1: i32) -> (i32, i32) {
    %c0_i32 = arith.constant 0 : i32
    %c0_i32_0 = arith.constant 0 : i32
    %c0_i32_1 = arith.constant 0 : i32
    return %c0_i32, %c0_i32_0 : i32, i32
  }
  func.func @transform_6(%arg0: i32, %arg1: i32) -> (i32, i32) {
    %c0_i32 = arith.constant 0 : i32
    %c0_i32_0 = arith.constant 0 : i32
    return %arg0, %c0_i32 : i32, i32
  }
}

</mosaic_0001>

<llo_original>
// kernel: tpu_custom_call.1
$region0: #{tpu_custom_call.1}
  #allocation0 [shape = 'u32[]', space=smem, size = 0x4, offset = 0x4, fixed_abs, tag = 'smem constant byte address 0x4 - core index']
  #allocation1 [shape = 'u32[144,128]{1,0:T(1,128)}', space=vmem, size = 0x12000, scoped, tag = 'internal scratch']
  #allocation2 [shape = 'f32[8,32]{1,0:T(8,128)}', space=vmem, size = 0x1000, scoped, tag = 'scratch operand']
  %s0 = inlined_call_operand.vmem [shape: s32[8,1], index: 0, kind: input, shape index: {}]
  %s1 = inlined_call_operand.hbm [shape: bf16[8,8,32], index: 1, kind: input, shape index: {}]
  %s2 = inlined_call_operand.vmem [shape: bf16[32,128], index: 2, kind: input, shape index: {}]
  %s3 = inlined_call_operand.vmem [shape: f32[1,128], index: 3, kind: input, shape index: {}]
  %s4 = inlined_call_operand.vmem [shape: s32[1,128], index: 4, kind: input, shape index: {}]
  %s5 = inlined_call_operand.hbm [shape: f32[128,128], index: 5, kind: input, shape index: {}]
  %s6 = inlined_call_operand.hbm [shape: f32[8,128], index: 6, kind: output, shape index: {}]
  %s7 = sld [smem:[#allocation0]]
  $region50: #{tpu_custom_call.1} parent=0
    _
  %s9 = ssub.s32 1, %s7
  %s10 = scalar_select 0, %s9, %s7
  $region1: #{tpu_custom_call.1} parent=0
    #allocation3 [shape = 'u8[16384]{0}', space=vmem, size = 0x4000, scoped, tag = 'input window, operand 1, single buffered']
    #allocation4 [shape = 's32[1]{0}', space=sflag, size = 0x4, scoped, tag = 'scoped memory for tpu_custom_call.1']
    #allocation5 [shape = 's32[1]{0}', space=sflag, size = 0x4, scoped, tag = 'scoped memory for tpu_custom_call.1']
    #allocation6 [shape = 'u8[65536]{0}', space=vmem, size = 0x10000, scoped, tag = 'input window, operand 5, single buffered']
    #allocation7 [shape = 's32[1]{0}', space=sflag, size = 0x4, scoped, tag = 'scoped memory for tpu_custom_call.1']
    #allocation8 [shape = 'u8[4096]{0}', space=vmem, size = 0x1000, scoped, tag = 'output window, operand 0, single buffered']
    %11 = vsyncpa [#allocation4], 0
    %12 = vsyncpa [#allocation7], 0
    %13 = vsyncpa [#allocation5], 0
    // Predicated region
    $region2: #{tpu_custom_call.1} parent=1 // pred_check
      _
    $region3: #{tpu_custom_call.1} parent=1 // pred_check_branch
      %15 = sbr.rel (0) target = $region5
    $region4: #{tpu_custom_call.1} parent=1 // pred_region
      _
    $region5: #{tpu_custom_call.1} parent=1 // pred_fallthru
      _
    // Predicated region
    $region6: #{tpu_custom_call.1} parent=1 // pred_check
      _
    $region7: #{tpu_custom_call.1} parent=1 // pred_check_branch
      %17 = sbr.rel (0) target = $region9
    $region8: #{tpu_custom_call.1} parent=1 // pred_region
      %s19 = ssub.s32 512, 512
      %20 = vsyncadd [#allocation4], %s19
      %s21 = sshll.u32 [#allocation3], 4
      %s22 = int_to_ptr.vmem [resolvable:$true] %s21
      %27 = dma.hbm_to_vmem [thread:$0]  %s1, 512, %s22, [#allocation4], 64, 64, 4
    $region9: #{tpu_custom_call.1} parent=1 // pred_fallthru
      _
    // Predicated region
    $region10: #{tpu_custom_call.1} parent=1 // pred_check
      _
    $region11: #{tpu_custom_call.1} parent=1 // pred_check_branch
      %29 = sbr.rel (0) target = $region13
    $region12: #{tpu_custom_call.1} parent=1 // pred_region
      _
    $region13: #{tpu_custom_call.1} parent=1 // pred_fallthru
      _
    // Predicated region
    $region14: #{tpu_custom_call.1} parent=1 // pred_check
      _
    $region15: #{tpu_custom_call.1} parent=1 // pred_check_branch
      %31 = sbr.rel (0) target = $region17
    $region16: #{tpu_custom_call.1} parent=1 // pred_region
      _
    $region17: #{tpu_custom_call.1} parent=1 // pred_fallthru
      _
    // Predicated region
    $region18: #{tpu_custom_call.1} parent=1 // pred_check
      _
    $region19: #{tpu_custom_call.1} parent=1 // pred_check_branch
      %33 = sbr.rel (0) target = $region21
    $region20: #{tpu_custom_call.1} parent=1 // pred_region
      _
    $region21: #{tpu_custom_call.1} parent=1 // pred_fallthru
      _
    // Predicated region
    $region22: #{tpu_custom_call.1} parent=1 // pred_check
      _
    $region23: #{tpu_custom_call.1} parent=1 // pred_check_branch
      %35 = sbr.rel (0) target = $region25
    $region24: #{tpu_custom_call.1} parent=1 // pred_region
      %s37 = ssub.s32 2048, 2048
      %38 = vsyncadd [#allocation7], %s37
      %s39 = sshll.u32 [#allocation6], 4
      %s40 = int_to_ptr.vmem [resolvable:$true] %s39
      %45 = dma.hbm_to_vmem [thread:$0]  %s5, 2048, %s40, [#allocation7], 128, 128, 8
    $region25: #{tpu_custom_call.1} parent=1 // pred_fallthru
      _
    // Predicated region
    $region26: #{tpu_custom_call.1} parent=1 // pred_check
      _
    $region27: #{tpu_custom_call.1} parent=1 // pred_check_branch
      %47 = sbr.rel (0) target = $region29
    $region28: #{tpu_custom_call.1} parent=1 // pred_region
      %48 = dma.done [#allocation4], 512
    $region29: #{tpu_custom_call.1} parent=1 // pred_fallthru
      _
    // Predicated region
    $region30: #{tpu_custom_call.1} parent=1 // pred_check
      _
    $region31: #{tpu_custom_call.1} parent=1 // pred_check_branch
      %50 = sbr.rel (0) target = $region33
    $region32: #{tpu_custom_call.1} parent=1 // pred_region
      %51 = dma.done [#allocation7], 2048
    $region33: #{tpu_custom_call.1} parent=1 // pred_fallthru
      _
    %p53 = scmp.eq.s32.totalorder 0, 0
    // Predicated region
    $region34: #{tpu_custom_call.1} parent=1 // pred_check
      %p54 = pneg %p53
    $region35: #{tpu_custom_call.1} parent=1 // pred_check_branch
      %56 = sbr.rel (%p54) target = $region37
    $region36: #{tpu_custom_call.1} parent=1 // pred_region
      %vm57 = vcmask 261120
      %58 = vst.msk [vmem:[#allocation2] sm:$0xff] %vm57, 0.0
    $region37: #{tpu_custom_call.1} parent=1 // pred_fallthru
      _
    %v59 = vld [vmem:[#allocation2] sm:$0xff]
    %v60 = vld [vmem:[#allocation3] sm:$0xf]
    %v61 = vld [vmem:[#allocation3 + $0x4] sm:$0xf]
    %v62 = vld [vmem:[#allocation3 + $0x8] sm:$0xf]
    %v63 = vld [vmem:[#allocation3 + $0xc] sm:$0xf]
    %v64 = vld [vmem:[#allocation3 + $0x10] sm:$0xf]
    %v65 = vld [vmem:[#allocation3 + $0x14] sm:$0xf]
    %v66 = vld [vmem:[#allocation3 + $0x18] sm:$0xf]
    %v67 = vld [vmem:[#allocation3 + $0x1c] sm:$0xf]
    %v68 = vunpack.c.l.bf16 %v60
    %v69 = vunpack.c.l.bf16 %v61
    %v70 = vunpack.c.l.bf16 %v62
    %v71 = vunpack.c.l.bf16 %v63
    %v72 = vunpack.c.l.bf16 %v64
    %v73 = vunpack.c.l.bf16 %v65
    %v74 = vunpack.c.l.bf16 %v66
    %v75 = vunpack.c.l.bf16 %v67
    %vm76 = vcmask 261120
    %v77 = vsel %vm76, %v68, 0.0
    %v78 = vrot.slane %v77, 4
    %v79 = vadd.f32 %v77, %v78
    %v80 = vrot.slane %v79, 2
    %v81 = vadd.f32 %v79, %v80
    %v82 = vrot.slane %v81, 1
    %v83 = vadd.f32 %v81, %v82
    %v84 = vsel %vm76, %v69, 0.0
    %v85 = vrot.slane %v84, 4
    %v86 = vadd.f32 %v84, %v85
    %v87 = vrot.slane %v86, 2
    %v88 = vadd.f32 %v86, %v87
    %v89 = vrot.slane %v88, 1
    %v90 = vadd.f32 %v88, %v89
    %v91 = vsel %vm76, %v70, 0.0
    %v92 = vrot.slane %v91, 4
    %v93 = vadd.f32 %v91, %v92
    %v94 = vrot.slane %v93, 2
    %v95 = vadd.f32 %v93, %v94
    %v96 = vrot.slane %v95, 1
    %v97 = vadd.f32 %v95, %v96
    %v98 = vsel %vm76, %v71, 0.0
    %v99 = vrot.slane %v98, 4
    %v100 = vadd.f32 %v98, %v99
    %v101 = vrot.slane %v100, 2
    %v102 = vadd.f32 %v100, %v101
    %v103 = vrot.slane %v102, 1
    %v104 = vadd.f32 %v102, %v103
    %v105 = vsel %vm76, %v72, 0.0
    %v106 = vrot.slane %v105, 4
    %v107 = vadd.f32 %v105, %v106
    %v108 = vrot.slane %v107, 2
    %v109 = vadd.f32 %v107, %v108
    %v110 = vrot.slane %v109, 1
    %v111 = vadd.f32 %v109, %v110
    %v112 = vsel %vm76, %v73, 0.0
    %v113 = vrot.slane %v112, 4
    %v114 = vadd.f32 %v112, %v113
    %v115 = vrot.slane %v114, 2
    %v116 = vadd.f32 %v114, %v115
    %v117 = vrot.slane %v116, 1
    %v118 = vadd.f32 %v116, %v117
    %v119 = vsel %vm76, %v74, 0.0
    %v120 = vrot.slane %v119, 4
    %v121 = vadd.f32 %v119, %v120
    %v122 = vrot.slane %v121, 2
    %v123 = vadd.f32 %v121, %v122
    %v124 = vrot.slane %v123, 1
    %v125 = vadd.f32 %v123, %v124
    %v126 = vsel %vm76, %v75, 0.0
    %v127 = vrot.slane %v126, 4
    %v128 = vadd.f32 %v126, %v127
    %v129 = vrot.slane %v128, 2
    %v130 = vadd.f32 %v128, %v129
    %v131 = vrot.slane %v130, 1
    %v132 = vadd.f32 %v130, %v131
    %vm141 = vcmask 1041409
    %v142 = vsel %vm141, %v90, %v83
    %vm143 = vcmask 1042434
    %v144 = vsel %vm143, %v97, %v142
    %vm145 = vcmask 1043459
    %v146 = vsel %vm145, %v104, %v144
    %vm147 = vcmask 1044484
    %v148 = vsel %vm147, %v111, %v146
    %vm149 = vcmask 1045509
    %v150 = vsel %vm149, %v118, %v148
    %vm151 = vcmask 1046534
    %v152 = vsel %vm151, %v125, %v150
    %vm153 = vcmask 1047559
    %v154 = vsel %vm153, %v132, %v152
    %v156 = vadd.f32 %v59, %v154
    %157 = vst.msk [vmem:[#allocation2] sm:$0xff] %vm76, %v156
    // Predicated region
    $region38: #{tpu_custom_call.1} parent=1 // pred_check
      %p158 = pneg %p53
    $region39: #{tpu_custom_call.1} parent=1 // pred_check_branch
      %160 = sbr.rel (%p158) target = $region41
    $region40: #{tpu_custom_call.1} parent=1 // pred_region
      %v161 = vld [vmem:[#allocation2] sm:$0xff]
      %v162 = vmul.f32 %v161, 0.125
      %v163 = vpack.c.bf16 %v162, %v162
      %v164 = vld [vmem:[%s2] sm:$0xf]
      %v165 = vld [vmem:[%s2 + $0x4] sm:$0xf]
      %v166 = vld [vmem:[%s2 + $0x8] sm:$0xf]
      %v167 = vld [vmem:[%s2 + $0xc] sm:$0xf]
      %v168 = vld [vmem:[%s3] sm:$0x1]
      %v170 = vlaneseq
      %v171 = vshrl.u32 %v170, 7
      %v172 = vsub.s32 0, %v171
      %v173 = vrot.slane %v168, %v172
      %v179 = vunpack.c.l.b16 %v164
      %v180 = vunpack.c.l.b16 %v165
      %v181 = vunpack.c.l.b16 %v166
      %v182 = vunpack.c.l.b16 %v167
      %v183 = vpack.c.b16 %v180, %v179
      %v184 = vpack.c.b16 %v182, %v181
      %v188 = vsel %vm76, %v163, 0
      %190 = vmatprep.subr.bf16.mxu0 0
      %191 = vmatpush1.bf16.msra.mxu0 %v183
      %192 = vmatprep.subr.bf16.mxu0 0
      %193 = vmatpush1.bf16.msra.mxu0 %v184
      %194 = vmatprep.subr.bf16.mxu0 0
      %195 = vmatpush1.bf16.msra.mxu0 0
      %196 = vmatprep.subr.bf16.mxu0 0
      %197 = vmatpush1.bf16.msra.mxu0 0
      %198 = vmatprep.subr.bf16.mxu0 0
      %199 = vmatpush1.bf16.msra.mxu0 0
      %200 = vmatprep.subr.bf16.mxu0 0
      %201 = vmatpush1.bf16.msra.mxu0 0
      %202 = vmatprep.subr.bf16.mxu0 0
      %203 = vmatpush1.bf16.msra.mxu0 0
      %204 = vmatprep.subr.bf16.mxu0 0
      %205 = vmatpush1.bf16.msra.mxu0 0
      %206 = vmatprep.subr.bf16.mxu0 0
      %207 = vmatpush1.bf16.msra.mxu0 0
      %208 = vmatprep.subr.bf16.mxu0 0
      %209 = vmatpush1.bf16.msra.mxu0 0
      %210 = vmatprep.subr.bf16.mxu0 0
      %211 = vmatpush1.bf16.msra.mxu0 0
      %212 = vmatprep.subr.bf16.mxu0 0
      %213 = vmatpush1.bf16.msra.mxu0 0
      %214 = vmatprep.subr.bf16.mxu0 0
      %215 = vmatpush1.bf16.msra.mxu0 0
      %216 = vmatprep.subr.bf16.mxu0 0
      %217 = vmatpush1.bf16.msra.mxu0 0
      %218 = vmatprep.subr.bf16.mxu0 0
      %219 = vmatpush1.bf16.msra.mxu0 0
      %220 = vmatprep.subr.bf16.mxu0 0
      %221 = vmatpush1.bf16.msra.mxu0 0
      %222 = vmatprep.mubr.bf16.mxu0 0
      %223 = vmatmul.mubr.bf16.gmra.mrb[0].mxu0 %v188
      %v224 = vpop.f32.mrb[0].mxu0
      %v225 = vadd.f32 %v173, %v224
      %v226 = vpop.f32.mrb[0].mxu0
      %v227 = vpop.f32.mrb[0].mxu0
      %v228 = vpop.f32.mrb[0].mxu0
      %229 = vdwg.mxu0
      %v230 = vld [vmem:[%s4] sm:$0x1]
      %v231 = vld [vmem:[%s0] sm:$0xff]
      %v232 = vlaneseq
      %v233 = vshrl.u32 %v232, 7
      %v234 = vsub.s32 0, %v233
      %v235 = vrot.slane %v230, %v234
      %236 = vset.pattern.permute.xlu0 0
      %237 = vperm.xlu0 %236, %v231
      %v238 = vpop.permute.xlu0 %237
      %vm239 = vcmp.eq.s32.totalorder %v235, %v238
      %v240 = vsel %vm239, 1, 0
      %v241 = vcvt.s32.f32 %v240
      %v242 = vmul.f32 %v225, %v241
      %v243 = vld [vmem:[#allocation6] sm:$0xff]
      %v244 = vld [vmem:[#allocation6 + $0x8] sm:$0xff]
      %v245 = vld [vmem:[#allocation6 + $0x10] sm:$0xff]
      %v246 = vld [vmem:[#allocation6 + $0x18] sm:$0xff]
      %v247 = vld [vmem:[#allocation6 + $0x20] sm:$0xff]
      %v248 = vld [vmem:[#allocation6 + $0x28] sm:$0xff]
      %v249 = vld [vmem:[#allocation6 + $0x30] sm:$0xff]
      %v250 = vld [vmem:[#allocation6 + $0x38] sm:$0xff]
      %v251 = vld [vmem:[#allocation6 + $0x40] sm:$0xff]
      %v252 = vld [vmem:[#allocation6 + $0x48] sm:$0xff]
      %v253 = vld [vmem:[#allocation6 + $0x50] sm:$0xff]
      %v254 = vld [vmem:[#allocation6 + $0x58] sm:$0xff]
      %v255 = vld [vmem:[#allocation6 + $0x60] sm:$0xff]
      %v256 = vld [vmem:[#allocation6 + $0x68] sm:$0xff]
      %v257 = vld [vmem:[#allocation6 + $0x70] sm:$0xff]
      %v258 = vld [vmem:[#allocation6 + $0x78] sm:$0xff]
      %259 = vmatprep.subr.mxu0 0.0
      %260 = vmatpush1.msra.mxu0 %v243
      %261 = vmatprep.subr.mxu0 0.0
      %262 = vmatpush1.msra.mxu0 %v244
      %263 = vmatprep.subr.mxu0 0.0
      %264 = vmatpush1.msra.mxu0 %v245
      %265 = vmatprep.subr.mxu0 0.0
      %266 = vmatpush1.msra.mxu0 %v246
      %267 = vmatprep.subr.mxu0 0.0
      %268 = vmatpush1.msra.mxu0 %v247
      %269 = vmatprep.subr.mxu0 0.0
      %270 = vmatpush1.msra.mxu0 %v248
      %271 = vmatprep.subr.mxu0 0.0
      %272 = vmatpush1.msra.mxu0 %v249
      %273 = vmatprep.subr.mxu0 0.0
      %274 = vmatpush1.msra.mxu0 %v250
      %275 = vmatprep.subr.mxu0 0.0
      %276 = vmatpush1.msra.mxu0 %v251
      %277 = vmatprep.subr.mxu0 0.0
      %278 = vmatpush1.msra.mxu0 %v252
      %279 = vmatprep.subr.mxu0 0.0
      %280 = vmatpush1.msra.mxu0 %v253
      %281 = vmatprep.subr.mxu0 0.0
      %282 = vmatpush1.msra.mxu0 %v254
      %283 = vmatprep.subr.mxu0 0.0
      %284 = vmatpush1.msra.mxu0 %v255
      %285 = vmatprep.subr.mxu0 0.0
      %286 = vmatpush1.msra.mxu0 %v256
      %287 = vmatprep.subr.mxu0 0.0
      %288 = vmatpush1.msra.mxu0 %v257
      %289 = vmatprep.subr.mxu0 0.0
      %290 = vmatpush1.msra.mxu0 %v258
      %291 = vmatprep.subr.mxu0 0.0
      %292 = vmatpush1.msra.mxu0 0.0
      %293 = vmatprep.subr.mxu0 0.0
      %294 = vmatpush1.msra.mxu0 0.0
      %295 = vmatprep.subr.mxu0 0.0
      %296 = vmatpush1.msra.mxu0 0.0
      %297 = vmatprep.subr.mxu0 0.0
      %298 = vmatpush1.msra.mxu0 0.0
      %299 = vmatprep.subr.mxu0 0.0
      %300 = vmatpush1.msra.mxu0 0.0
      %301 = vmatprep.subr.mxu0 0.0
      %302 = vmatpush1.msra.mxu0 0.0
      %303 = vmatprep.subr.mxu0 0.0
      %304 = vmatpush1.msra.mxu0 0.0
      %305 = vmatprep.subr.mxu0 0.0
      %306 = vmatpush1.msra.mxu0 0.0
      %307 = vmatprep.subr.mxu0 0.0
      %308 = vmatpush1.msra.mxu0 0.0
      %309 = vmatprep.subr.mxu0 0.0
      %310 = vmatpush1.msra.mxu0 0.0
      %311 = vmatprep.subr.mxu0 0.0
      %312 = vmatpush1.msra.mxu0 0.0
      %313 = vmatprep.subr.mxu0 0.0
      %314 = vmatpush1.msra.mxu0 0.0
      %315 = vmatprep.subr.mxu0 0.0
      %316 = vmatpush1.msra.mxu0 0.0
      %317 = vmatprep.subr.mxu0 0.0
      %318 = vmatpush1.msra.mxu0 0.0
      %319 = vmatprep.subr.mxu0 0.0
      %320 = vmatpush1.msra.mxu0 0.0
      %321 = vmatprep.subr.mxu0 0.0
      %322 = vmatpush1.msra.mxu0 0.0
      %323 = vmatprep.mubr.f32.mxu0 0.0
      %324 = vmatmul.mubr.f32.gmra.mrb[0].mxu0 %v242
      %v325 = vpop.f32.mrb[0].mxu0
      %v326 = vadd.f32 0.0, %v325
      %v327 = vpop.f32.mrb[0].mxu0
      %328 = vdwg.mxu0
      %329 = vst [vmem:[#allocation8] sm:$0xff] %v326
    $region41: #{tpu_custom_call.1} parent=1 // pred_fallthru
      _
    // Predicated region
    $region42: #{tpu_custom_call.1} parent=1 // pred_check
      _
    $region43: #{tpu_custom_call.1} parent=1 // pred_check_branch
      %331 = sbr.rel (0) target = $region45
    $region44: #{tpu_custom_call.1} parent=1 // pred_region
      %s333 = ssub.s32 128, 128
      %334 = vsyncadd [#allocation5], %s333
      %s336 = sshll.u32 [#allocation8], 4
      %s337 = int_to_ptr.vmem [resolvable:$true] %s336
      %339 = dma.vmem_to_hbm [thread:$0]  %s337, 128, %s6, [#allocation5]
    $region45: #{tpu_custom_call.1} parent=1 // pred_fallthru
      _
    // Predicated region
    $region46: #{tpu_custom_call.1} parent=1 // pred_check
      _
    $region47: #{tpu_custom_call.1} parent=1 // pred_check_branch
      %341 = sbr.rel (0) target = $region49
    $region48: #{tpu_custom_call.1} parent=1 // pred_region
      %342 = dma.done [#allocation5], 128
    $region49: #{tpu_custom_call.1} parent=1 // pred_fallthru
      _
    %343 = vsyncpa [#allocation4], 1
    %344 = vsyncpa [#allocation7], 1
    %345 = vsyncpa [#allocation5], 1

</llo_original>
